<compile_context>
chip_gen: v7x
topology: tpu7x:2x2x1
jax: 0.10.0
libtpu: 0.0.40
codegen_flags: <defaults>
</compile_context>

<pallas_src>
import numpy as np
import jax
import jax.numpy as jnp
from jax.experimental import pallas as pl
from jax.experimental.pallas import tpu as pltpu


def _round_up(x: int, m: int) -> int:
    return ((x + m - 1) // m) * m


# ------------------------------------------------------------------
# Fused kernel: pooling (selection-matrix matmul, accumulated over node
# tiles) + concat-layout finalize + MLPReadout (L x Linear+ReLU, Linear).
# ------------------------------------------------------------------
def _fused_kernel_factory(num_layers: int):
    def kernel(idx_ref, scale_ref, h_ref, *rest):
        params = rest[: 2 * num_layers]           # w0, b0, w1, b1, ...
        out_ref = rest[2 * num_layers]
        acc_ref = rest[2 * num_layers + 1]

        P, TB, K = idx_ref.shape
        TN = h_ref.shape[0]
        ni = pl.program_id(1)

        @pl.when(ni == 0)
        def _init():
            acc_ref[...] = jnp.zeros_like(acc_ref)

        # Selection matrix for this node tile: single compare + single K-reduce.
        idx = idx_ref[...].reshape(P * TB, K)                               # [P*TB, K]
        node_ids = ni * TN + jax.lax.broadcasted_iota(
            jnp.int32, (P * TB, K, TN), 2)                                  # global node ids
        sel = (node_ids == idx[:, :, None]).astype(jnp.float32).sum(axis=1)  # [P*TB, TN]

        # One flattened MXU matmul for all depths, accumulated over node tiles.
        acc_ref[...] += jnp.dot(sel, h_ref[...],
                                preferred_element_type=jnp.float32)         # [P*TB, F]

        @pl.when(ni == pl.num_programs(1) - 1)
        def _finalize():
            acc = acc_ref[...]
            # Concat layout [TB, P*F] (torch.cat(emb_list, dim=1)), then mean scale.
            feats = jnp.concatenate(
                [acc[d * TB:(d + 1) * TB, :] for d in range(P)], axis=1)
            y = feats * scale_ref[...]
            for l in range(num_layers):
                w = params[2 * l][...]
                b = params[2 * l + 1][...]
                y = jnp.dot(y, w, preferred_element_type=jnp.float32) + b
                if l < num_layers - 1:
                    y = jnp.maximum(y, 0.0)                                  # ReLU
            out_ref[...] = y.astype(out_ref.dtype)

    return kernel


# ------------------------------------------------------------------
# Wrapper: pads everything to TPU-friendly shapes, builds specs, calls kernel.
#   h:   [N, F] float
#   idx: [P, B, K] int32, padded with -1 (P = depth+1; idx[0,:,0] = center nodes)
#   cnt: [P, B] float counts (0 for the `None` neighbor-set case)
#   weights[l]: [d_l, d_{l+1}], biases[l]: [1, d_{l+1}]  (MLPReadout, L+1 layers)
# ------------------------------------------------------------------
def order_pooling_readout_forward(h, idx, cnt, weights, biases, pooling="mean"):
    assert pooling in ("mean", "sum"), "max pooling not implemented (see TODO)"
    N, F = h.shape
    P, B, K = idx.shape
    L = len(weights) - 1
    out_dim = int(weights[-1].shape[1])

    # ---- padding / tiling choices ----
    F_pad = _round_up(F, 128)
    out_pad = _round_up(out_dim, 128)

    B_pad = _round_up(B, 8)
    if B_pad <= 256:
        tile_b = B_pad
    else:
        tile_b = 256
        B_pad = _round_up(B, tile_b)

    if N <= 512:
        N_pad = _round_up(N, 128)
        tile_n = N_pad
    else:
        tile_n = 512
        N_pad = _round_up(N, tile_n)

    # ---- pad inputs ----
    h_p = jnp.pad(h.astype(jnp.float32), ((0, N_pad - N), (0, F_pad - F)))
    idx_p = jnp.pad(idx.astype(jnp.int32), ((0, 0), (0, B_pad - B), (0, 0)),
                    constant_values=-1)

    if pooling == "mean":
        inv = 1.0 / jnp.maximum(cnt.astype(jnp.float32), 1.0)       # [P, B]
    else:  # sum
        inv = jnp.ones(cnt.shape, jnp.float32)
    scale = jnp.repeat(inv.T, F_pad, axis=1)                        # [B, P*F_pad]
    scale = jnp.pad(scale, ((0, B_pad - B), (0, 0)))

    # ---- pad MLP params (zero-padding keeps the math exact through ReLU) ----
    hid_pad = [P * F_pad] + [_round_up(int(w.shape[1]), 128) for w in weights[:-1]] + [out_pad]
    w_p, b_p = [], []
    h1 = int(weights[0].shape[1])
    w0 = weights[0].astype(jnp.float32).reshape(P, F, h1)
    w0 = jnp.pad(w0, ((0, 0), (0, F_pad - F), (0, hid_pad[1] - h1)))
    w_p.append(w0.reshape(P * F_pad, hid_pad[1]))
    for l in range(1, L + 1):
        w = weights[l].astype(jnp.float32)
        w_p.append(jnp.pad(w, ((0, hid_pad[l] - w.shape[0]),
                               (0, hid_pad[l + 1] - w.shape[1]))))
    for l in range(L + 1):
        b = biases[l].astype(jnp.float32).reshape(1, -1)
        b_p.append(jnp.pad(b, ((0, 0), (0, hid_pad[l + 1] - b.shape[1]))))

    # ---- specs ----
    PF = P * F_pad
    grid = (B_pad // tile_b, N_pad // tile_n)

    in_specs = [
        pl.BlockSpec((P, tile_b, K), lambda bi, ni: (0, bi, 0)),     # idx
        pl.BlockSpec((tile_b, PF), lambda bi, ni: (bi, 0)),          # scale
        pl.BlockSpec((tile_n, F_pad), lambda bi, ni: (ni, 0)),       # h (tiled over N)
    ]
    args = [idx_p, scale, h_p]
    for w, b in zip(w_p, b_p):                                       # weights resident
        in_specs.append(pl.BlockSpec(tuple(w.shape), lambda bi, ni: (0, 0)))
        in_specs.append(pl.BlockSpec(tuple(b.shape), lambda bi, ni: (0, 0)))
        args += [w, b]

    out_specs = pl.BlockSpec((tile_b, out_pad), lambda bi, ni: (bi, 0))

    # ---- explicit VMEM budget (tiles + weights + temporaries, with headroom) ----
    est = (2 * tile_n * F_pad * 4                  # h, double-buffered
           + 2 * P * tile_b * K * 4                # idx
           + 2 * tile_b * PF * 4                   # scale
           + sum(int(np.prod(w.shape)) for w in w_p) * 4
           + sum(int(np.prod(b.shape)) for b in b_p) * 4
           + 2 * tile_b * out_pad * 4              # out
           + P * tile_b * F_pad * 4                # accumulator scratch
           + P * tile_b * K * tile_n * 4           # compare temporary
           + P * tile_b * tile_n * 4)              # sel
    vmem_limit = max(16 * 1024 * 1024, min(2 * est + (2 << 20), 48 * 1024 * 1024))

    out = pl.pallas_call(
        _fused_kernel_factory(L + 1),
        out_shape=jax.ShapeDtypeStruct((B_pad, out_pad), jnp.float32),
        grid_spec=pltpu.PrefetchScalarGridSpec(
            num_scalar_prefetch=0,
            grid=grid,
            in_specs=in_specs,
            out_specs=out_specs,
            scratch_shapes=[pltpu.VMEM((P * tile_b, F_pad), jnp.float32)],
        ),
        compiler_params=pltpu.CompilerParams(
            dimension_semantics=("parallel", "arbitrary"),
            vmem_limit_bytes=int(vmem_limit),
        ),
    )(*args)

    return out[:B, :out_dim]


# ------------------------------------------------------------------
# Deterministic parameter init (PyTorch nn.Linear-style uniform bounds)
# ------------------------------------------------------------------
def init_mlp_params(key, input_dim, output_dim, L):
    dims = [input_dim // (2 ** l) for l in range(L + 1)] + [output_dim]
    weights, biases = [], []
    for l in range(L + 1):
        key, kw, kb = jax.random.split(key, 3)
        bound = 1.0 / np.sqrt(dims[l])
        weights.append(jax.random.uniform(kw, (dims[l], dims[l + 1]), jnp.float32, -bound, bound))
        biases.append(jax.random.uniform(kb, (1, dims[l + 1]), jnp.float32, -bound, bound))
    return weights, biases


if __name__ == "__main__":
    # Small shapes consistent with the module's forward
    N_NODES, INPUT_DIM = 32, 32
    DEPTH, B, K_MAX = 2, 8, 4
    OUTPUT_DIM, READOUT_N_LAYERS = 4, 2
    POOLING = "mean"

    key = jax.random.PRNGKey(0)
    key, kh = jax.random.split(key)
    h = jax.random.normal(kh, (N_NODES, INPUT_DIM), jnp.float32)

    # Synthetic pos_info (deterministic):
    #   pos_info[0]      -> B center-node indices
    #   pos_info[i>0][b] -> neighbor index set, or None
    rng = np.random.RandomState(0)
    centers = rng.choice(N_NODES, size=B, replace=False).astype(np.int32)
    pos_info = [centers]
    for i in range(1, DEPTH + 1):
        nbrs = []
        for b in range(B):
            if (i == 2) and (b % 3 == 0):
                nbrs.append(None)                              # exercise the zeros_like branch
            else:
                n = rng.randint(1, K_MAX + 1)
                nbrs.append(rng.choice(N_NODES, size=n, replace=False).astype(np.int32))
        pos_info.append(nbrs)

    # Pack pos_info into dense padded index / count tensors (glue).
    idx = np.full((DEPTH + 1, B, K_MAX), -1, dtype=np.int32)
    cnt = np.zeros((DEPTH + 1, B), dtype=np.float32)
    idx[0, :, 0] = pos_info[0]
    cnt[0, :] = 1.0
    for i in range(1, DEPTH + 1):
        for b, nbrs in enumerate(pos_info[i]):
            if nbrs is None:
                continue
            idx[i, b, : len(nbrs)] = nbrs
            cnt[i, b] = float(len(nbrs))
    idx = jnp.asarray(idx)
    cnt = jnp.asarray(cnt)

    weights, biases = init_mlp_params(key, INPUT_DIM * (DEPTH + 1), OUTPUT_DIM, READOUT_N_LAYERS)

    y = order_pooling_readout_forward(h, idx, cnt, weights, biases, pooling=POOLING)
    y = jax.block_until_ready(y)

    # Pure-numpy reference of the torch forward (eval mode).
    h_np = np.asarray(h)
    emb_list = [h_np[np.asarray(pos_info[0])]]
    for i in range(1, DEPTH + 1):
        rows = []
        for nbrs in pos_info[i]:
            if nbrs is None:
                rows.append(np.zeros_like(h_np[0]))
            else:
                rows.append(h_np[nbrs].mean(axis=0))
        emb_list.append(np.stack(rows))
    feats_ref = np.concatenate(emb_list, axis=1)
    y_ref = feats_ref
    for l in range(READOUT_N_LAYERS + 1):
        y_ref = y_ref @ np.asarray(weights[l]) + np.asarray(biases[l])
        if l < READOUT_N_LAYERS:
            y_ref = np.maximum(y_ref, 0.0)

    assert y.shape == (B, OUTPUT_DIM)
    np.testing.assert_allclose(np.asarray(y), y_ref, rtol=1e-4, atol=1e-5)
    print("KERNEL_OK")
</pallas_src>

<mosaic_0001>
module attributes {stable_mosaic.version = 11 : i64} {
  func.func @kernel(%arg0: i32, %arg1: i32, %arg2: memref<3x8x4xi32, #tpu.memory_space<vmem>>, %arg3: memref<8x384xf32, #tpu.memory_space<vmem>>, %arg4: memref<128x128xf32, #tpu.memory_space<vmem>>, %arg5: memref<384x128xf32, #tpu.memory_space<vmem>>, %arg6: memref<1x128xf32, #tpu.memory_space<vmem>>, %arg7: memref<128x128xf32, #tpu.memory_space<vmem>>, %arg8: memref<1x128xf32, #tpu.memory_space<vmem>>, %arg9: memref<128x128xf32, #tpu.memory_space<vmem>>, %arg10: memref<1x128xf32, #tpu.memory_space<vmem>>, %arg11: memref<8x128xf32, #tpu.memory_space<vmem>>, %arg12: memref<24x128xf32, #tpu.memory_space<vmem>>) attributes {dimension_semantics = [#tpu.dimension_semantics<parallel>, #tpu.dimension_semantics<arbitrary>], iteration_bounds = array<i64: 1, 1>, scalar_prefetch = 0 : i64, scratch_operands = 1 : i64, tpu.core_type = #tpu.core_type<tc>, window_params = [{transform_indices = @transform_0, window_bounds = array<i64: 3, 8, 4>}, {transform_indices = @transform_1, window_bounds = array<i64: 8, 384>}, {transform_indices = @transform_2, window_bounds = array<i64: 128, 128>}, {pipeline_mode = #tpu.pipeline_mode<synchronous>, transform_indices = @transform_3, window_bounds = array<i64: 384, 128>}, {pipeline_mode = #tpu.pipeline_mode<synchronous>, transform_indices = @transform_4, window_bounds = array<i64: 1, 128>}, {pipeline_mode = #tpu.pipeline_mode<synchronous>, transform_indices = @transform_5, window_bounds = array<i64: 128, 128>}, {pipeline_mode = #tpu.pipeline_mode<synchronous>, transform_indices = @transform_6, window_bounds = array<i64: 1, 128>}, {pipeline_mode = #tpu.pipeline_mode<synchronous>, transform_indices = @transform_7, window_bounds = array<i64: 128, 128>}, {pipeline_mode = #tpu.pipeline_mode<synchronous>, transform_indices = @transform_8, window_bounds = array<i64: 1, 128>}, {transform_indices = @transform_9, window_bounds = array<i64: 8, 128>}]} {
    %c0_i32 = arith.constant 0 : i32
    %0 = arith.cmpi eq, %arg1, %c0_i32 : i32
    %1 = arith.extui %0 : i1 to i32
    %c0_i32_0 = arith.constant 0 : i32
    %2 = arith.cmpi ne, %1, %c0_i32_0 : i32
    scf.if %2 {
      %cst_12 = arith.constant 0.000000e+00 : f32
      %23 = vector.broadcast %cst_12 : f32 to vector<24x128xf32>
      %c0_13 = arith.constant 0 : index
      %c0_14 = arith.constant 0 : index
      %24 = vector.load %arg12[%c0_13, %c0_14] : memref<24x128xf32, #tpu.memory_space<vmem>>, vector<24x128xf32>
      tpu.vector_store %arg12[%c0_13, %c0_14], %23 {strides = array<i32>} : memref<24x128xf32, #tpu.memory_space<vmem>>, vector<24x128xf32>,
    } else {
    }
    %c0 = arith.constant 0 : index
    %c0_1 = arith.constant 0 : index
    %c0_2 = arith.constant 0 : index
    %3 = vector.load %arg2[%c0, %c0_1, %c0_2] : memref<3x8x4xi32, #tpu.memory_space<vmem>>, vector<3x8x4xi32>
    %4 = vector.shape_cast %3 : vector<3x8x4xi32> to vector<24x4xi32>
    %c128_i32 = arith.constant 128 : i32
    %5 = arith.muli %arg1, %c128_i32 : i32
    %6 = tpu.iota {dimensions = array<i32: 2>} : vector<24x4x128xi32>
    %7 = vector.broadcast %5 : i32 to vector<24x4x128xi32>
    %8 = arith.addi %7, %6 : vector<24x4x128xi32>
    %9 = vector.shape_cast %4 : vector<24x4xi32> to vector<24x4x1xi32>
    %10 = vector.broadcast %9 : vector<24x4x1xi32> to vector<24x4x128xi32>
    %11 = arith.cmpi eq, %8, %10 : vector<24x4x128xi32>
    %12 = arith.extui %11 : vector<24x4x128xi1> to vector<24x4x128xi32>
    %13 = arith.sitofp %12 : vector<24x4x128xi32> to vector<24x4x128xf32>
    %cst = arith.constant dense<0.000000e+00> : vector<24x128xf32>
    %14 = vector.multi_reduction <add>, %13, %cst [1] : vector<24x4x128xf32> to vector<24x128xf32>
    %c0_3 = arith.constant 0 : index
    %c0_4 = arith.constant 0 : index
    %15 = vector.load %arg12[%c0_3, %c0_4] : memref<24x128xf32, #tpu.memory_space<vmem>>, vector<24x128xf32>
    %c0_5 = arith.constant 0 : index
    %c0_6 = arith.constant 0 : index
    %16 = vector.load %arg4[%c0_5, %c0_6] : memref<128x128xf32, #tpu.memory_space<vmem>>, vector<128x128xf32>
    %cst_7 = arith.constant dense<0.000000e+00> : vector<24x128xf32>
    %17 = tpu.matmul %14, %16, %cst_7 {dimension_numbers = #tpu.dot_dimension_numbers<[1], [0], [0], [1], [0, 0, 1, 1], [], []>} : vector<24x128xf32>, vector<128x128xf32>, vector<24x128xf32> -> vector<24x128xf32>
    %18 = arith.addf %15, %17 : vector<24x128xf32>
    %c0_8 = arith.constant 0 : index
    %c0_9 = arith.constant 0 : index
    %19 = vector.load %arg12[%c0_8, %c0_9] : memref<24x128xf32, #tpu.memory_space<vmem>>, vector<24x128xf32>
    tpu.vector_store %arg12[%c0_8, %c0_9], %18 {strides = array<i32>} : memref<24x128xf32, #tpu.memory_space<vmem>>, vector<24x128xf32>,
    %c0_i32_10 = arith.constant 0 : i32
    %20 = arith.cmpi eq, %arg1, %c0_i32_10 : i32
    %21 = arith.extui %20 : i1 to i32
    %c0_i32_11 = arith.constant 0 : i32
    %22 = arith.cmpi ne, %21, %c0_i32_11 : i32
    scf.if %22 {
      %c0_12 = arith.constant 0 : index
      %c0_13 = arith.constant 0 : index
      %23 = vector.load %arg12[%c0_12, %c0_13] : memref<24x128xf32, #tpu.memory_space<vmem>>, vector<24x128xf32>
      %24 = vector.extract_strided_slice %23 {offsets = [0, 0], sizes = [8, 128], strides = [1, 1]} : vector<24x128xf32> to vector<8x128xf32>
      %25 = vector.extract_strided_slice %23 {offsets = [8, 0], sizes = [8, 128], strides = [1, 1]} : vector<24x128xf32> to vector<8x128xf32>
      %26 = vector.extract_strided_slice %23 {offsets = [16, 0], sizes = [8, 128], strides = [1, 1]} : vector<24x128xf32> to vector<8x128xf32>
      %27 = tpu.concatenate %24, %25, %26 in 1 : vector<8x128xf32>, vector<8x128xf32>, vector<8x128xf32> -> vector<8x384xf32>
      %c0_14 = arith.constant 0 : index
      %c0_15 = arith.constant 0 : index
      %28 = vector.load %arg3[%c0_14, %c0_15] : memref<8x384xf32, #tpu.memory_space<vmem>>, vector<8x384xf32>
      %29 = arith.mulf %27, %28 : vector<8x384xf32>
      %c0_16 = arith.constant 0 : index
      %c0_17 = arith.constant 0 : index
      %30 = vector.load %arg5[%c0_16, %c0_17] : memref<384x128xf32, #tpu.memory_space<vmem>>, vector<384x128xf32>
      %c0_18 = arith.constant 0 : index
      %c0_19 = arith.constant 0 : index
      %31 = vector.load %arg6[%c0_18, %c0_19] : memref<1x128xf32, #tpu.memory_space<vmem>>, vector<1x128xf32>
      %cst_20 = arith.constant dense<0.000000e+00> : vector<8x128xf32>
      %32 = tpu.matmul %29, %30, %cst_20 {dimension_numbers = #tpu.dot_dimension_numbers<[1], [0], [0], [1], [0, 0, 1, 1], [], []>} : vector<8x384xf32>, vector<384x128xf32>, vector<8x128xf32> -> vector<8x128xf32>
      %33 = vector.broadcast %31 : vector<1x128xf32> to vector<8x128xf32>
      %34 = arith.addf %32, %33 : vector<8x128xf32>
      %cst_21 = arith.constant 0.000000e+00 : f32
      %35 = vector.broadcast %cst_21 : f32 to vector<8x128xf32>
      %36 = arith.maximumf %34, %35 : vector<8x128xf32>
      %c0_22 = arith.constant 0 : index
      %c0_23 = arith.constant 0 : index
      %37 = vector.load %arg7[%c0_22, %c0_23] : memref<128x128xf32, #tpu.memory_space<vmem>>, vector<128x128xf32>
      %c0_24 = arith.constant 0 : index
      %c0_25 = arith.constant 0 : index
      %38 = vector.load %arg8[%c0_24, %c0_25] : memref<1x128xf32, #tpu.memory_space<vmem>>, vector<1x128xf32>
      %cst_26 = arith.constant dense<0.000000e+00> : vector<8x128xf32>
      %39 = tpu.matmul %36, %37, %cst_26 {dimension_numbers = #tpu.dot_dimension_numbers<[1], [0], [0], [1], [0, 0, 1, 1], [], []>} : vector<8x128xf32>, vector<128x128xf32>, vector<8x128xf32> -> vector<8x128xf32>
      %40 = vector.broadcast %38 : vector<1x128xf32> to vector<8x128xf32>
      %41 = arith.addf %39, %40 : vector<8x128xf32>
      %cst_27 = arith.constant 0.000000e+00 : f32
      %42 = vector.broadcast %cst_27 : f32 to vector<8x128xf32>
      %43 = arith.maximumf %41, %42 : vector<8x128xf32>
      %c0_28 = arith.constant 0 : index
      %c0_29 = arith.constant 0 : index
      %44 = vector.load %arg9[%c0_28, %c0_29] : memref<128x128xf32, #tpu.memory_space<vmem>>, vector<128x128xf32>
      %c0_30 = arith.constant 0 : index
      %c0_31 = arith.constant 0 : index
      %45 = vector.load %arg10[%c0_30, %c0_31] : memref<1x128xf32, #tpu.memory_space<vmem>>, vector<1x128xf32>
      %cst_32 = arith.constant dense<0.000000e+00> : vector<8x128xf32>
      %46 = tpu.matmul %43, %44, %cst_32 {dimension_numbers = #tpu.dot_dimension_numbers<[1], [0], [0], [1], [0, 0, 1, 1], [], []>} : vector<8x128xf32>, vector<128x128xf32>, vector<8x128xf32> -> vector<8x128xf32>
      %47 = vector.broadcast %45 : vector<1x128xf32> to vector<8x128xf32>
      %48 = arith.addf %46, %47 : vector<8x128xf32>
      %c0_33 = arith.constant 0 : index
      %c0_34 = arith.constant 0 : index
      %49 = vector.load %arg11[%c0_33, %c0_34] : memref<8x128xf32, #tpu.memory_space<vmem>>, vector<8x128xf32>
      tpu.vector_store %arg11[%c0_33, %c0_34], %48 {strides = array<i32>} : memref<8x128xf32, #tpu.memory_space<vmem>>, vector<8x128xf32>,
    } else {
    }
    return
  }
  func.func @transform_0(%arg0: i32, %arg1: i32) -> (i32, i32, i32) {
    %c0_i32 = arith.constant 0 : i32
    %c0_i32_0 = arith.constant 0 : i32
    %c0_i32_1 = arith.constant 0 : i32
    return %c0_i32, %arg0, %c0_i32_0 : i32, i32, i32
  }
  func.func @transform_1(%arg0: i32, %arg1: i32) -> (i32, i32) {
    %c0_i32 = arith.constant 0 : i32
    %c0_i32_0 = arith.constant 0 : i32
    return %arg0, %c0_i32 : i32, i32
  }
  func.func @transform_2(%arg0: i32, %arg1: i32) -> (i32, i32) {
    %c0_i32 = arith.constant 0 : i32
    %c0_i32_0 = arith.constant 0 : i32
    return %arg1, %c0_i32 : i32, i32
  }
  func.func @transform_3(%arg0: i32, %arg1: i32) -> (i32, i32) {
    %c0_i32 = arith.constant 0 : i32
    %c0_i32_0 = arith.constant 0 : i32
    %c0_i32_1 = arith.constant 0 : i32
    return %c0_i32, %c0_i32_0 : i32, i32
  }
  func.func @transform_4(%arg0: i32, %arg1: i32) -> (i32, i32) {
    %c0_i32 = arith.constant 0 : i32
    %c0_i32_0 = arith.constant 0 : i32
    %c0_i32_1 = arith.constant 0 : i32
    return %c0_i32, %c0_i32_0 : i32, i32
  }
  func.func @transform_5(%arg0: i32, %arg1: i32) -> (i32, i32) {
    %c0_i32 = arith.constant 0 : i32
    %c0_i32_0 = arith.constant 0 : i32
    %c0_i32_1 = arith.constant 0 : i32
    return %c0_i32, %c0_i32_0 : i32, i32
  }
  func.func @transform_6(%arg0: i32, %arg1: i32) -> (i32, i32) {
    %c0_i32 = arith.constant 0 : i32
    %c0_i32_0 = arith.constant 0 : i32
    %c0_i32_1 = arith.constant 0 : i32
    return %c0_i32, %c0_i32_0 : i32, i32
  }
  func.func @transform_7(%arg0: i32, %arg1: i32) -> (i32, i32) {
    %c0_i32 = arith.constant 0 : i32
    %c0_i32_0 = arith.constant 0 : i32
    %c0_i32_1 = arith.constant 0 : i32
    return %c0_i32, %c0_i32_0 : i32, i32
  }
  func.func @transform_8(%arg0: i32, %arg1: i32) -> (i32, i32) {
    %c0_i32 = arith.constant 0 : i32
    %c0_i32_0 = arith.constant 0 : i32
    %c0_i32_1 = arith.constant 0 : i32
    return %c0_i32, %c0_i32_0 : i32, i32
  }
  func.func @transform_9(%arg0: i32, %arg1: i32) -> (i32, i32) {
    %c0_i32 = arith.constant 0 : i32
    %c0_i32_0 = arith.constant 0 : i32
    return %arg0, %c0_i32 : i32, i32
  }
}

</mosaic_0001>

<llo_original>
// kernel: tpu_custom_call.1
$region0: #{tpu_custom_call.1}
  #allocation0 [shape = 'u32[]', space=smem, size = 0x4, offset = 0x4, fixed_abs, tag = 'smem constant byte address 0x4 - core index']
  #allocation1 [shape = 'u32[144,128]{1,0:T(1,128)}', space=vmem, size = 0x12000, scoped, tag = 'internal scratch']
  #allocation2 [shape = 'f32[24,128]{1,0:T(8,128)}', space=vmem, size = 0x3000, scoped, tag = 'scratch operand']
  %s0 = inlined_call_operand.vmem [shape: s32[3,8,4], index: 0, kind: input, shape index: {}]
  %s1 = inlined_call_operand.vmem [shape: f32[8,384], index: 1, kind: input, shape index: {}]
  %s2 = inlined_call_operand.hbm [shape: f32[128,128], index: 2, kind: input, shape index: {}]
  %s3 = inlined_call_operand.hbm [shape: f32[384,128], index: 3, kind: input, shape index: {}]
  %s4 = inlined_call_operand.vmem [shape: f32[1,128], index: 4, kind: input, shape index: {}]
  %s5 = inlined_call_operand.hbm [shape: f32[128,128], index: 5, kind: input, shape index: {}]
  %s6 = inlined_call_operand.vmem [shape: f32[1,128], index: 6, kind: input, shape index: {}]
  %s7 = inlined_call_operand.hbm [shape: f32[128,128], index: 7, kind: input, shape index: {}]
  %s8 = inlined_call_operand.vmem [shape: f32[1,128], index: 8, kind: input, shape index: {}]
  %s9 = inlined_call_operand.hbm [shape: f32[8,128], index: 9, kind: output, shape index: {}]
  %s10 = sld [smem:[#allocation0]]
  $region70: #{tpu_custom_call.1} parent=0
    _
  %s12 = ssub.s32 1, %s10
  %s13 = scalar_select 0, %s12, %s10
  $region1: #{tpu_custom_call.1} parent=0
    #allocation3 [shape = 'u8[65536]{0}', space=vmem, size = 0x10000, scoped, tag = 'input window, operand 2, single buffered']
    #allocation4 [shape = 's32[1]{0}', space=sflag, size = 0x4, scoped, tag = 'scoped memory for tpu_custom_call.1']
    #allocation5 [shape = 's32[1]{0}', space=sflag, size = 0x4, scoped, tag = 'scoped memory for tpu_custom_call.1']
    #allocation6 [shape = 'u8[196608]{0}', space=vmem, size = 0x30000, scoped, tag = 'input window, operand 3, single buffered']
    #allocation7 [shape = 's32[1]{0}', space=sflag, size = 0x4, scoped, tag = 'scoped memory for tpu_custom_call.1']
    #allocation8 [shape = 'u8[65536]{0}', space=vmem, size = 0x10000, scoped, tag = 'input window, operand 5, single buffered']
    #allocation9 [shape = 'u8[65536]{0}', space=vmem, size = 0x10000, scoped, tag = 'input window, operand 7, single buffered']
    #allocation10 [shape = 's32[1]{0}', space=sflag, size = 0x4, scoped, tag = 'scoped memory for tpu_custom_call.1']
    #allocation11 [shape = 'u8[4096]{0}', space=vmem, size = 0x1000, scoped, tag = 'output window, operand 0, single buffered']
    %14 = vsyncpa [#allocation4], 0
    %15 = vsyncpa [#allocation7], 0
    %16 = vsyncpa [#allocation10], 0
    %17 = vsyncpa [#allocation5], 0
    // Predicated region
    $region2: #{tpu_custom_call.1} parent=1 // pred_check
      _
    $region3: #{tpu_custom_call.1} parent=1 // pred_check_branch
      %19 = sbr.rel (0) target = $region5
    $region4: #{tpu_custom_call.1} parent=1 // pred_region
      _
    $region5: #{tpu_custom_call.1} parent=1 // pred_fallthru
      _
    // Predicated region
    $region6: #{tpu_custom_call.1} parent=1 // pred_check
      _
    $region7: #{tpu_custom_call.1} parent=1 // pred_check_branch
      %21 = sbr.rel (0) target = $region9
    $region8: #{tpu_custom_call.1} parent=1 // pred_region
      _
    $region9: #{tpu_custom_call.1} parent=1 // pred_fallthru
      _
    // Predicated region
    $region10: #{tpu_custom_call.1} parent=1 // pred_check
      _
    $region11: #{tpu_custom_call.1} parent=1 // pred_check_branch
      %23 = sbr.rel (0) target = $region13
    $region12: #{tpu_custom_call.1} parent=1 // pred_region
      %s25 = ssub.s32 2048, 2048
      %26 = vsyncadd [#allocation4], %s25
      %s27 = sshll.u32 [#allocation3], 4
      %s28 = int_to_ptr.vmem [resolvable:$true] %s27
      %33 = dma.hbm_to_vmem [thread:$0]  %s2, 2048, %s28, [#allocation4], 128, 128, 8
    $region13: #{tpu_custom_call.1} parent=1 // pred_fallthru
      _
    // Predicated region
    $region14: #{tpu_custom_call.1} parent=1 // pred_check
      _
    $region15: #{tpu_custom_call.1} parent=1 // pred_check_branch
      %35 = sbr.rel (0) target = $region17
    $region16: #{tpu_custom_call.1} parent=1 // pred_region
      %s37 = ssub.s32 6144, 6144
      %38 = vsyncadd [#allocation7], %s37
      %s39 = sshll.u32 [#allocation6], 4
      %s40 = int_to_ptr.vmem [resolvable:$true] %s39
      %45 = dma.hbm_to_vmem [thread:$0]  %s3, 6144, %s40, [#allocation7], 128, 128, 8
    $region17: #{tpu_custom_call.1} parent=1 // pred_fallthru
      _
    // Predicated region
    $region18: #{tpu_custom_call.1} parent=1 // pred_check
      _
    $region19: #{tpu_custom_call.1} parent=1 // pred_check_branch
      %47 = sbr.rel (0) target = $region21
    $region20: #{tpu_custom_call.1} parent=1 // pred_region
      _
    $region21: #{tpu_custom_call.1} parent=1 // pred_fallthru
      _
    // Predicated region
    $region22: #{tpu_custom_call.1} parent=1 // pred_check
      _
    $region23: #{tpu_custom_call.1} parent=1 // pred_check_branch
      %49 = sbr.rel (0) target = $region25
    $region24: #{tpu_custom_call.1} parent=1 // pred_region
      %s51 = ssub.s32 2048, 2048
      %52 = vsyncadd [#allocation7], %s51
      %s53 = sshll.u32 [#allocation8], 4
      %s54 = int_to_ptr.vmem [resolvable:$true] %s53
      %59 = dma.hbm_to_vmem [thread:$0]  %s5, 2048, %s54, [#allocation7], 128, 128, 8
    $region25: #{tpu_custom_call.1} parent=1 // pred_fallthru
      _
    // Predicated region
    $region26: #{tpu_custom_call.1} parent=1 // pred_check
      _
    $region27: #{tpu_custom_call.1} parent=1 // pred_check_branch
      %61 = sbr.rel (0) target = $region29
    $region28: #{tpu_custom_call.1} parent=1 // pred_region
      _
    $region29: #{tpu_custom_call.1} parent=1 // pred_fallthru
      _
    // Predicated region
    $region30: #{tpu_custom_call.1} parent=1 // pred_check
      _
    $region31: #{tpu_custom_call.1} parent=1 // pred_check_branch
      %63 = sbr.rel (0) target = $region33
    $region32: #{tpu_custom_call.1} parent=1 // pred_region
      %s65 = ssub.s32 2048, 2048
      %66 = vsyncadd [#allocation10], %s65
      %s67 = sshll.u32 [#allocation9], 4
      %s68 = int_to_ptr.vmem [resolvable:$true] %s67
      %73 = dma.hbm_to_vmem [thread:$0]  %s7, 2048, %s68, [#allocation10], 128, 128, 8
    $region33: #{tpu_custom_call.1} parent=1 // pred_fallthru
      _
    // Predicated region
    $region34: #{tpu_custom_call.1} parent=1 // pred_check
      _
    $region35: #{tpu_custom_call.1} parent=1 // pred_check_branch
      %75 = sbr.rel (0) target = $region37
    $region36: #{tpu_custom_call.1} parent=1 // pred_region
      _
    $region37: #{tpu_custom_call.1} parent=1 // pred_fallthru
      _
    // Predicated region
    $region38: #{tpu_custom_call.1} parent=1 // pred_check
      _
    $region39: #{tpu_custom_call.1} parent=1 // pred_check_branch
      %77 = sbr.rel (0) target = $region41
    $region40: #{tpu_custom_call.1} parent=1 // pred_region
      %78 = dma.done [#allocation4], 2048
    $region41: #{tpu_custom_call.1} parent=1 // pred_fallthru
      _
    // Predicated region
    $region42: #{tpu_custom_call.1} parent=1 // pred_check
      _
    $region43: #{tpu_custom_call.1} parent=1 // pred_check_branch
      %80 = sbr.rel (0) target = $region45
    $region44: #{tpu_custom_call.1} parent=1 // pred_region
      %81 = dma.done [#allocation7], 6144
    $region45: #{tpu_custom_call.1} parent=1 // pred_fallthru
      _
    // Predicated region
    $region46: #{tpu_custom_call.1} parent=1 // pred_check
      _
    $region47: #{tpu_custom_call.1} parent=1 // pred_check_branch
      %83 = sbr.rel (0) target = $region49
    $region48: #{tpu_custom_call.1} parent=1 // pred_region
      %84 = dma.done [#allocation7], 2048
    $region49: #{tpu_custom_call.1} parent=1 // pred_fallthru
      _
    // Predicated region
    $region50: #{tpu_custom_call.1} parent=1 // pred_check
      _
    $region51: #{tpu_custom_call.1} parent=1 // pred_check_branch
      %86 = sbr.rel (0) target = $region53
    $region52: #{tpu_custom_call.1} parent=1 // pred_region
      %87 = dma.done [#allocation10], 2048
    $region53: #{tpu_custom_call.1} parent=1 // pred_fallthru
      _
    %p88 = scmp.eq.s32.totalorder 0, 0
    // Predicated region
    $region54: #{tpu_custom_call.1} parent=1 // pred_check
      %p89 = pneg %p88
    $region55: #{tpu_custom_call.1} parent=1 // pred_check_branch
      %91 = sbr.rel (%p89) target = $region57
    $region56: #{tpu_custom_call.1} parent=1 // pred_region
      %92 = vst [vmem:[#allocation2] sm:$0xff] 0.0
      %93 = vst [vmem:[#allocation2 + $0x8] sm:$0xff] 0.0
      %94 = vst [vmem:[#allocation2 + $0x10] sm:$0xff] 0.0
    $region57: #{tpu_custom_call.1} parent=1 // pred_fallthru
      _
    %v95 = vld [vmem:[%s0] sm:$0xff]
    %v96 = vld [vmem:[%s0 + $0x8] sm:$0xff]
    %v97 = vld [vmem:[%s0 + $0x10] sm:$0xff]
    %s98 = smul.u32 0, 128
    %v99 = vlaneseq
    %v100 = vand.u32 %v99, 127
    %v101 = vstv %s98
    %v102 = vadd.s32 %v101, %v100
    %v103 = vlaneseq
    %v104 = vshrl.u32 %v103, 7
    %v105 = vsub.s32 0, %v104
    %v106 = vrot.slane %v95, %v105
    %108 = vbcast.lane.b32.xlu0 %v106, 256
    %v109 = vpop.permute.xlu0 %108
    %v110 = vlaneseq
    %v111 = vshrl.u32 %v110, 7
    %v112 = vsub.s32 1, %v111
    %v113 = vrot.slane %v95, %v112
    %115 = vbcast.lane.b32.xlu0 %v113, 256
    %v116 = vpop.permute.xlu0 %115
    %v117 = vlaneseq
    %v118 = vshrl.u32 %v117, 7
    %v119 = vsub.s32 2, %v118
    %v120 = vrot.slane %v95, %v119
    %122 = vbcast.lane.b32.xlu0 %v120, 256
    %v123 = vpop.permute.xlu0 %122
    %v124 = vlaneseq
    %v125 = vshrl.u32 %v124, 7
    %v126 = vsub.s32 3, %v125
    %v127 = vrot.slane %v95, %v126
    %129 = vbcast.lane.b32.xlu0 %v127, 256
    %v130 = vpop.permute.xlu0 %129
    %v131 = vlaneseq
    %v132 = vshrl.u32 %v131, 7
    %v133 = vsub.s32 4, %v132
    %v134 = vrot.slane %v95, %v133
    %136 = vbcast.lane.b32.xlu0 %v134, 256
    %v137 = vpop.permute.xlu0 %136
    %v138 = vlaneseq
    %v139 = vshrl.u32 %v138, 7
    %v140 = vsub.s32 5, %v139
    %v141 = vrot.slane %v95, %v140
    %143 = vbcast.lane.b32.xlu0 %v141, 256
    %v144 = vpop.permute.xlu0 %143
    %v145 = vlaneseq
    %v146 = vshrl.u32 %v145, 7
    %v147 = vsub.s32 6, %v146
    %v148 = vrot.slane %v95, %v147
    %150 = vbcast.lane.b32.xlu0 %v148, 256
    %v151 = vpop.permute.xlu0 %150
    %v152 = vlaneseq
    %v153 = vshrl.u32 %v152, 7
    %v154 = vsub.s32 7, %v153
    %v155 = vrot.slane %v95, %v154
    %157 = vbcast.lane.b32.xlu0 %v155, 256
    %v158 = vpop.permute.xlu0 %157
    %v159 = vlaneseq
    %v160 = vshrl.u32 %v159, 7
    %v161 = vsub.s32 0, %v160
    %v162 = vrot.slane %v96, %v161
    %164 = vbcast.lane.b32.xlu0 %v162, 256
    %v165 = vpop.permute.xlu0 %164
    %v166 = vlaneseq
    %v167 = vshrl.u32 %v166, 7
    %v168 = vsub.s32 1, %v167
    %v169 = vrot.slane %v96, %v168
    %171 = vbcast.lane.b32.xlu0 %v169, 256
    %v172 = vpop.permute.xlu0 %171
    %v173 = vlaneseq
    %v174 = vshrl.u32 %v173, 7
    %v175 = vsub.s32 2, %v174
    %v176 = vrot.slane %v96, %v175
    %178 = vbcast.lane.b32.xlu0 %v176, 256
    %v179 = vpop.permute.xlu0 %178
    %v180 = vlaneseq
    %v181 = vshrl.u32 %v180, 7
    %v182 = vsub.s32 3, %v181
    %v183 = vrot.slane %v96, %v182
    %185 = vbcast.lane.b32.xlu0 %v183, 256
    %v186 = vpop.permute.xlu0 %185
    %v187 = vlaneseq
    %v188 = vshrl.u32 %v187, 7
    %v189 = vsub.s32 4, %v188
    %v190 = vrot.slane %v96, %v189
    %192 = vbcast.lane.b32.xlu0 %v190, 256
    %v193 = vpop.permute.xlu0 %192
    %v194 = vlaneseq
    %v195 = vshrl.u32 %v194, 7
    %v196 = vsub.s32 5, %v195
    %v197 = vrot.slane %v96, %v196
    %199 = vbcast.lane.b32.xlu0 %v197, 256
    %v200 = vpop.permute.xlu0 %199
    %v201 = vlaneseq
    %v202 = vshrl.u32 %v201, 7
    %v203 = vsub.s32 6, %v202
    %v204 = vrot.slane %v96, %v203
    %206 = vbcast.lane.b32.xlu0 %v204, 256
    %v207 = vpop.permute.xlu0 %206
    %v208 = vlaneseq
    %v209 = vshrl.u32 %v208, 7
    %v210 = vsub.s32 7, %v209
    %v211 = vrot.slane %v96, %v210
    %213 = vbcast.lane.b32.xlu0 %v211, 256
    %v214 = vpop.permute.xlu0 %213
    %v215 = vlaneseq
    %v216 = vshrl.u32 %v215, 7
    %v217 = vsub.s32 0, %v216
    %v218 = vrot.slane %v97, %v217
    %220 = vbcast.lane.b32.xlu0 %v218, 256
    %v221 = vpop.permute.xlu0 %220
    %v222 = vlaneseq
    %v223 = vshrl.u32 %v222, 7
    %v224 = vsub.s32 1, %v223
    %v225 = vrot.slane %v97, %v224
    %227 = vbcast.lane.b32.xlu0 %v225, 256
    %v228 = vpop.permute.xlu0 %227
    %v229 = vlaneseq
    %v230 = vshrl.u32 %v229, 7
    %v231 = vsub.s32 2, %v230
    %v232 = vrot.slane %v97, %v231
    %234 = vbcast.lane.b32.xlu0 %v232, 256
    %v235 = vpop.permute.xlu0 %234
    %v236 = vlaneseq
    %v237 = vshrl.u32 %v236, 7
    %v238 = vsub.s32 3, %v237
    %v239 = vrot.slane %v97, %v238
    %241 = vbcast.lane.b32.xlu0 %v239, 256
    %v242 = vpop.permute.xlu0 %241
    %v243 = vlaneseq
    %v244 = vshrl.u32 %v243, 7
    %v245 = vsub.s32 4, %v244
    %v246 = vrot.slane %v97, %v245
    %248 = vbcast.lane.b32.xlu0 %v246, 256
    %v249 = vpop.permute.xlu0 %248
    %v250 = vlaneseq
    %v251 = vshrl.u32 %v250, 7
    %v252 = vsub.s32 5, %v251
    %v253 = vrot.slane %v97, %v252
    %255 = vbcast.lane.b32.xlu0 %v253, 256
    %v256 = vpop.permute.xlu0 %255
    %v257 = vlaneseq
    %v258 = vshrl.u32 %v257, 7
    %v259 = vsub.s32 6, %v258
    %v260 = vrot.slane %v97, %v259
    %262 = vbcast.lane.b32.xlu0 %v260, 256
    %v263 = vpop.permute.xlu0 %262
    %v264 = vlaneseq
    %v265 = vshrl.u32 %v264, 7
    %v266 = vsub.s32 7, %v265
    %v267 = vrot.slane %v97, %v266
    %269 = vbcast.lane.b32.xlu0 %v267, 256
    %v270 = vpop.permute.xlu0 %269
    %vm271 = vcmp.eq.s32.totalorder %v102, %v109
    %vm272 = vcmp.eq.s32.totalorder %v102, %v116
    %vm273 = vcmp.eq.s32.totalorder %v102, %v123
    %vm274 = vcmp.eq.s32.totalorder %v102, %v130
    %vm275 = vcmp.eq.s32.totalorder %v102, %v137
    %vm276 = vcmp.eq.s32.totalorder %v102, %v144
    %vm277 = vcmp.eq.s32.totalorder %v102, %v151
    %vm278 = vcmp.eq.s32.totalorder %v102, %v158
    %vm279 = vcmp.eq.s32.totalorder %v102, %v165
    %vm280 = vcmp.eq.s32.totalorder %v102, %v172
    %vm281 = vcmp.eq.s32.totalorder %v102, %v179
    %vm282 = vcmp.eq.s32.totalorder %v102, %v186
    %vm283 = vcmp.eq.s32.totalorder %v102, %v193
    %vm284 = vcmp.eq.s32.totalorder %v102, %v200
    %vm285 = vcmp.eq.s32.totalorder %v102, %v207
    %vm286 = vcmp.eq.s32.totalorder %v102, %v214
    %vm287 = vcmp.eq.s32.totalorder %v102, %v221
    %vm288 = vcmp.eq.s32.totalorder %v102, %v228
    %vm289 = vcmp.eq.s32.totalorder %v102, %v235
    %vm290 = vcmp.eq.s32.totalorder %v102, %v242
    %vm291 = vcmp.eq.s32.totalorder %v102, %v249
    %vm292 = vcmp.eq.s32.totalorder %v102, %v256
    %vm293 = vcmp.eq.s32.totalorder %v102, %v263
    %vm294 = vcmp.eq.s32.totalorder %v102, %v270
    %v295 = vsel %vm271, 1, 0
    %v296 = vsel %vm272, 1, 0
    %v297 = vsel %vm273, 1, 0
    %v298 = vsel %vm274, 1, 0
    %v299 = vsel %vm275, 1, 0
    %v300 = vsel %vm276, 1, 0
    %v301 = vsel %vm277, 1, 0
    %v302 = vsel %vm278, 1, 0
    %v303 = vsel %vm279, 1, 0
    %v304 = vsel %vm280, 1, 0
    %v305 = vsel %vm281, 1, 0
    %v306 = vsel %vm282, 1, 0
    %v307 = vsel %vm283, 1, 0
    %v308 = vsel %vm284, 1, 0
    %v309 = vsel %vm285, 1, 0
    %v310 = vsel %vm286, 1, 0
    %v311 = vsel %vm287, 1, 0
    %v312 = vsel %vm288, 1, 0
    %v313 = vsel %vm289, 1, 0
    %v314 = vsel %vm290, 1, 0
    %v315 = vsel %vm291, 1, 0
    %v316 = vsel %vm292, 1, 0
    %v317 = vsel %vm293, 1, 0
    %v318 = vsel %vm294, 1, 0
    %v319 = vcvt.s32.f32 %v295
    %v320 = vcvt.s32.f32 %v296
    %v321 = vcvt.s32.f32 %v297
    %v322 = vcvt.s32.f32 %v298
    %v323 = vcvt.s32.f32 %v299
    %v324 = vcvt.s32.f32 %v300
    %v325 = vcvt.s32.f32 %v301
    %v326 = vcvt.s32.f32 %v302
    %v327 = vcvt.s32.f32 %v303
    %v328 = vcvt.s32.f32 %v304
    %v329 = vcvt.s32.f32 %v305
    %v330 = vcvt.s32.f32 %v306
    %v331 = vcvt.s32.f32 %v307
    %v332 = vcvt.s32.f32 %v308
    %v333 = vcvt.s32.f32 %v309
    %v334 = vcvt.s32.f32 %v310
    %v335 = vcvt.s32.f32 %v311
    %v336 = vcvt.s32.f32 %v312
    %v337 = vcvt.s32.f32 %v313
    %v338 = vcvt.s32.f32 %v314
    %v339 = vcvt.s32.f32 %v315
    %v340 = vcvt.s32.f32 %v316
    %v341 = vcvt.s32.f32 %v317
    %v342 = vcvt.s32.f32 %v318
    %vm343 = vcmask 1043456
    %v344 = vsel %vm343, %v319, 0.0
    %v345 = vrot.slane %v344, 4
    %v346 = vadd.f32 %v344, %v345
    %v347 = vrot.slane %v346, 2
    %v348 = vadd.f32 %v346, %v347
    %v349 = vrot.slane %v348, 1
    %v350 = vadd.f32 %v348, %v349
    %v351 = vsel %vm343, %v320, 0.0
    %v352 = vrot.slane %v351, 4
    %v353 = vadd.f32 %v351, %v352
    %v354 = vrot.slane %v353, 2
    %v355 = vadd.f32 %v353, %v354
    %v356 = vrot.slane %v355, 1
    %v357 = vadd.f32 %v355, %v356
    %v358 = vsel %vm343, %v321, 0.0
    %v359 = vrot.slane %v358, 4
    %v360 = vadd.f32 %v358, %v359
    %v361 = vrot.slane %v360, 2
    %v362 = vadd.f32 %v360, %v361
    %v363 = vrot.slane %v362, 1
    %v364 = vadd.f32 %v362, %v363
    %v365 = vsel %vm343, %v322, 0.0
    %v366 = vrot.slane %v365, 4
    %v367 = vadd.f32 %v365, %v366
    %v368 = vrot.slane %v367, 2
    %v369 = vadd.f32 %v367, %v368
    %v370 = vrot.slane %v369, 1
    %v371 = vadd.f32 %v369, %v370
    %v372 = vsel %vm343, %v323, 0.0
    %v373 = vrot.slane %v372, 4
    %v374 = vadd.f32 %v372, %v373
    %v375 = vrot.slane %v374, 2
    %v376 = vadd.f32 %v374, %v375
    %v377 = vrot.slane %v376, 1
    %v378 = vadd.f32 %v376, %v377
    %v379 = vsel %vm343, %v324, 0.0
    %v380 = vrot.slane %v379, 4
    %v381 = vadd.f32 %v379, %v380
    %v382 = vrot.slane %v381, 2
    %v383 = vadd.f32 %v381, %v382
    %v384 = vrot.slane %v383, 1
    %v385 = vadd.f32 %v383, %v384
    %v386 = vsel %vm343, %v325, 0.0
    %v387 = vrot.slane %v386, 4
    %v388 = vadd.f32 %v386, %v387
    %v389 = vrot.slane %v388, 2
    %v390 = vadd.f32 %v388, %v389
    %v391 = vrot.slane %v390, 1
    %v392 = vadd.f32 %v390, %v391
    %v393 = vsel %vm343, %v326, 0.0
    %v394 = vrot.slane %v393, 4
    %v395 = vadd.f32 %v393, %v394
    %v396 = vrot.slane %v395, 2
    %v397 = vadd.f32 %v395, %v396
    %v398 = vrot.slane %v397, 1
    %v399 = vadd.f32 %v397, %v398
    %v400 = vsel %vm343, %v327, 0.0
    %v401 = vrot.slane %v400, 4
    %v402 = vadd.f32 %v400, %v401
    %v403 = vrot.slane %v402, 2
    %v404 = vadd.f32 %v402, %v403
    %v405 = vrot.slane %v404, 1
    %v406 = vadd.f32 %v404, %v405
    %v407 = vsel %vm343, %v328, 0.0
    %v408 = vrot.slane %v407, 4
    %v409 = vadd.f32 %v407, %v408
    %v410 = vrot.slane %v409, 2
    %v411 = vadd.f32 %v409, %v410
    %v412 = vrot.slane %v411, 1
    %v413 = vadd.f32 %v411, %v412
    %v414 = vsel %vm343, %v329, 0.0
    %v415 = vrot.slane %v414, 4
    %v416 = vadd.f32 %v414, %v415
    %v417 = vrot.slane %v416, 2
    %v418 = vadd.f32 %v416, %v417
    %v419 = vrot.slane %v418, 1
    %v420 = vadd.f32 %v418, %v419
    %v421 = vsel %vm343, %v330, 0.0
    %v422 = vrot.slane %v421, 4
    %v423 = vadd.f32 %v421, %v422
    %v424 = vrot.slane %v423, 2
    %v425 = vadd.f32 %v423, %v424
    %v426 = vrot.slane %v425, 1
    %v427 = vadd.f32 %v425, %v426
    %v428 = vsel %vm343, %v331, 0.0
    %v429 = vrot.slane %v428, 4
    %v430 = vadd.f32 %v428, %v429
    %v431 = vrot.slane %v430, 2
    %v432 = vadd.f32 %v430, %v431
    %v433 = vrot.slane %v432, 1
    %v434 = vadd.f32 %v432, %v433
    %v435 = vsel %vm343, %v332, 0.0
    %v436 = vrot.slane %v435, 4
    %v437 = vadd.f32 %v435, %v436
    %v438 = vrot.slane %v437, 2
    %v439 = vadd.f32 %v437, %v438
    %v440 = vrot.slane %v439, 1
    %v441 = vadd.f32 %v439, %v440
    %v442 = vsel %vm343, %v333, 0.0
    %v443 = vrot.slane %v442, 4
    %v444 = vadd.f32 %v442, %v443
    %v445 = vrot.slane %v444, 2
    %v446 = vadd.f32 %v444, %v445
    %v447 = vrot.slane %v446, 1
    %v448 = vadd.f32 %v446, %v447
    %v449 = vsel %vm343, %v334, 0.0
    %v450 = vrot.slane %v449, 4
    %v451 = vadd.f32 %v449, %v450
    %v452 = vrot.slane %v451, 2
    %v453 = vadd.f32 %v451, %v452
    %v454 = vrot.slane %v453, 1
    %v455 = vadd.f32 %v453, %v454
    %v456 = vsel %vm343, %v335, 0.0
    %v457 = vrot.slane %v456, 4
    %v458 = vadd.f32 %v456, %v457
    %v459 = vrot.slane %v458, 2
    %v460 = vadd.f32 %v458, %v459
    %v461 = vrot.slane %v460, 1
    %v462 = vadd.f32 %v460, %v461
    %v463 = vsel %vm343, %v336, 0.0
    %v464 = vrot.slane %v463, 4
    %v465 = vadd.f32 %v463, %v464
    %v466 = vrot.slane %v465, 2
    %v467 = vadd.f32 %v465, %v466
    %v468 = vrot.slane %v467, 1
    %v469 = vadd.f32 %v467, %v468
    %v470 = vsel %vm343, %v337, 0.0
    %v471 = vrot.slane %v470, 4
    %v472 = vadd.f32 %v470, %v471
    %v473 = vrot.slane %v472, 2
    %v474 = vadd.f32 %v472, %v473
    %v475 = vrot.slane %v474, 1
    %v476 = vadd.f32 %v474, %v475
    %v477 = vsel %vm343, %v338, 0.0
    %v478 = vrot.slane %v477, 4
    %v479 = vadd.f32 %v477, %v478
    %v480 = vrot.slane %v479, 2
    %v481 = vadd.f32 %v479, %v480
    %v482 = vrot.slane %v481, 1
    %v483 = vadd.f32 %v481, %v482
    %v484 = vsel %vm343, %v339, 0.0
    %v485 = vrot.slane %v484, 4
    %v486 = vadd.f32 %v484, %v485
    %v487 = vrot.slane %v486, 2
    %v488 = vadd.f32 %v486, %v487
    %v489 = vrot.slane %v488, 1
    %v490 = vadd.f32 %v488, %v489
    %v491 = vsel %vm343, %v340, 0.0
    %v492 = vrot.slane %v491, 4
    %v493 = vadd.f32 %v491, %v492
    %v494 = vrot.slane %v493, 2
    %v495 = vadd.f32 %v493, %v494
    %v496 = vrot.slane %v495, 1
    %v497 = vadd.f32 %v495, %v496
    %v498 = vsel %vm343, %v341, 0.0
    %v499 = vrot.slane %v498, 4
    %v500 = vadd.f32 %v498, %v499
    %v501 = vrot.slane %v500, 2
    %v502 = vadd.f32 %v500, %v501
    %v503 = vrot.slane %v502, 1
    %v504 = vadd.f32 %v502, %v503
    %v505 = vsel %vm343, %v342, 0.0
    %v506 = vrot.slane %v505, 4
    %v507 = vadd.f32 %v505, %v506
    %v508 = vrot.slane %v507, 2
    %v509 = vadd.f32 %v507, %v508
    %v510 = vrot.slane %v509, 1
    %v511 = vadd.f32 %v509, %v510
    %v512 = vld [vmem:[#allocation2] sm:$0xff]
    %v513 = vld [vmem:[#allocation2 + $0x8] sm:$0xff]
    %v514 = vld [vmem:[#allocation2 + $0x10] sm:$0xff]
    %v515 = vld [vmem:[#allocation3] sm:$0xff]
    %v516 = vld [vmem:[#allocation3 + $0x8] sm:$0xff]
    %v517 = vld [vmem:[#allocation3 + $0x10] sm:$0xff]
    %v518 = vld [vmem:[#allocation3 + $0x18] sm:$0xff]
    %v519 = vld [vmem:[#allocation3 + $0x20] sm:$0xff]
    %v520 = vld [vmem:[#allocation3 + $0x28] sm:$0xff]
    %v521 = vld [vmem:[#allocation3 + $0x30] sm:$0xff]
    %v522 = vld [vmem:[#allocation3 + $0x38] sm:$0xff]
    %v523 = vld [vmem:[#allocation3 + $0x40] sm:$0xff]
    %v524 = vld [vmem:[#allocation3 + $0x48] sm:$0xff]
    %v525 = vld [vmem:[#allocation3 + $0x50] sm:$0xff]
    %v526 = vld [vmem:[#allocation3 + $0x58] sm:$0xff]
    %v527 = vld [vmem:[#allocation3 + $0x60] sm:$0xff]
    %v528 = vld [vmem:[#allocation3 + $0x68] sm:$0xff]
    %v529 = vld [vmem:[#allocation3 + $0x70] sm:$0xff]
    %v530 = vld [vmem:[#allocation3 + $0x78] sm:$0xff]
    %vm555 = vcmask 1041409
    %v556 = vsel %vm555, %v357, %v350
    %vm557 = vcmask 1042434
    %v558 = vsel %vm557, %v364, %v556
    %vm559 = vcmask 1043459
    %v560 = vsel %vm559, %v371, %v558
    %vm561 = vcmask 1044484
    %v562 = vsel %vm561, %v378, %v560
    %vm563 = vcmask 1045509
    %v564 = vsel %vm563, %v385, %v562
    %vm565 = vcmask 1046534
    %v566 = vsel %vm565, %v392, %v564
    %vm567 = vcmask 1047559
    %v568 = vsel %vm567, %v399, %v566
    %v569 = vsel %vm555, %v413, %v406
    %v570 = vsel %vm557, %v420, %v569
    %v571 = vsel %vm559, %v427, %v570
    %v572 = vsel %vm561, %v434, %v571
    %v573 = vsel %vm563, %v441, %v572
    %v574 = vsel %vm565, %v448, %v573
    %v575 = vsel %vm567, %v455, %v574
    %v576 = vsel %vm555, %v469, %v462
    %v577 = vsel %vm557, %v476, %v576
    %v578 = vsel %vm559, %v483, %v577
    %v579 = vsel %vm561, %v490, %v578
    %v580 = vsel %vm563, %v497, %v579
    %v581 = vsel %vm565, %v504, %v580
    %v582 = vsel %vm567, %v511, %v581
    %586 = vmatprep.subr.mxu0 0.0
    %587 = vmatpush1.msra.mxu0 %v515
    %588 = vmatprep.subr.mxu0 0.0
    %589 = vmatpush1.msra.mxu0 %v516
    %590 = vmatprep.subr.mxu0 0.0
    %591 = vmatpush1.msra.mxu0 %v517
    %592 = vmatprep.subr.mxu0 0.0
    %593 = vmatpush1.msra.mxu0 %v518
    %594 = vmatprep.subr.mxu0 0.0
    %595 = vmatpush1.msra.mxu0 %v519
    %596 = vmatprep.subr.mxu0 0.0
    %597 = vmatpush1.msra.mxu0 %v520
    %598 = vmatprep.subr.mxu0 0.0
    %599 = vmatpush1.msra.mxu0 %v521
    %600 = vmatprep.subr.mxu0 0.0
    %601 = vmatpush1.msra.mxu0 %v522
    %602 = vmatprep.subr.mxu0 0.0
    %603 = vmatpush1.msra.mxu0 %v523
    %604 = vmatprep.subr.mxu0 0.0
    %605 = vmatpush1.msra.mxu0 %v524
    %606 = vmatprep.subr.mxu0 0.0
    %607 = vmatpush1.msra.mxu0 %v525
    %608 = vmatprep.subr.mxu0 0.0
    %609 = vmatpush1.msra.mxu0 %v526
    %610 = vmatprep.subr.mxu0 0.0
    %611 = vmatpush1.msra.mxu0 %v527
    %612 = vmatprep.subr.mxu0 0.0
    %613 = vmatpush1.msra.mxu0 %v528
    %614 = vmatprep.subr.mxu0 0.0
    %615 = vmatpush1.msra.mxu0 %v529
    %616 = vmatprep.subr.mxu0 0.0
    %617 = vmatpush1.msra.mxu0 %v530
    %618 = vmatprep.subr.mxu0 0.0
    %619 = vmatpush1.msra.mxu0 0.0
    %620 = vmatprep.subr.mxu0 0.0
    %621 = vmatpush1.msra.mxu0 0.0
    %622 = vmatprep.subr.mxu0 0.0
    %623 = vmatpush1.msra.mxu0 0.0
    %624 = vmatprep.subr.mxu0 0.0
    %625 = vmatpush1.msra.mxu0 0.0
    %626 = vmatprep.subr.mxu0 0.0
    %627 = vmatpush1.msra.mxu0 0.0
    %628 = vmatprep.subr.mxu0 0.0
    %629 = vmatpush1.msra.mxu0 0.0
    %630 = vmatprep.subr.mxu0 0.0
    %631 = vmatpush1.msra.mxu0 0.0
    %632 = vmatprep.subr.mxu0 0.0
    %633 = vmatpush1.msra.mxu0 0.0
    %634 = vmatprep.subr.mxu0 0.0
    %635 = vmatpush1.msra.mxu0 0.0
    %636 = vmatprep.subr.mxu0 0.0
    %637 = vmatpush1.msra.mxu0 0.0
    %638 = vmatprep.subr.mxu0 0.0
    %639 = vmatpush1.msra.mxu0 0.0
    %640 = vmatprep.subr.mxu0 0.0
    %641 = vmatpush1.msra.mxu0 0.0
    %642 = vmatprep.subr.mxu0 0.0
    %643 = vmatpush1.msra.mxu0 0.0
    %644 = vmatprep.subr.mxu0 0.0
    %645 = vmatpush1.msra.mxu0 0.0
    %646 = vmatprep.subr.mxu0 0.0
    %647 = vmatpush1.msra.mxu0 0.0
    %648 = vmatprep.subr.mxu0 0.0
    %649 = vmatpush1.msra.mxu0 0.0
    %650 = vmatprep.mubr.f32.mxu0 0.0
    %651 = vmatmul.mubr.f32.gmra.mrb[0].mxu0 %v568
    %v652 = vpop.f32.mrb[0].mxu0
    %v653 = vadd.f32 0.0, %v652
    %v654 = vpop.f32.mrb[0].mxu0
    %655 = vmatprep.mubr.f32.mxu0 0.0
    %656 = vmatmul.mubr.f32.gmra.mrb[0].mxu0 %v575
    %v657 = vpop.f32.mrb[0].mxu0
    %v658 = vadd.f32 0.0, %v657
    %v659 = vpop.f32.mrb[0].mxu0
    %660 = vmatprep.mubr.f32.mxu0 0.0
    %661 = vmatmul.mubr.f32.gmra.mrb[0].mxu0 %v582
    %v662 = vpop.f32.mrb[0].mxu0
    %v663 = vadd.f32 0.0, %v662
    %v664 = vpop.f32.mrb[0].mxu0
    %665 = vdwg.mxu0
    %v666 = vadd.f32 %v512, %v653
    %v667 = vadd.f32 %v513, %v658
    %v668 = vadd.f32 %v514, %v663
    %669 = vst [vmem:[#allocation2] sm:$0xff] %v666
    %670 = vst [vmem:[#allocation2 + $0x8] sm:$0xff] %v667
    %671 = vst [vmem:[#allocation2 + $0x10] sm:$0xff] %v668
    // Predicated region
    $region58: #{tpu_custom_call.1} parent=1 // pred_check
      %p672 = pneg %p88
    $region59: #{tpu_custom_call.1} parent=1 // pred_check_branch
      %674 = sbr.rel (%p672) target = $region61
    $region60: #{tpu_custom_call.1} parent=1 // pred_region
      %v675 = vld [vmem:[#allocation2] sm:$0xff]
      %v676 = vld [vmem:[#allocation2 + $0x8] sm:$0xff]
      %v677 = vld [vmem:[#allocation2 + $0x10] sm:$0xff]
      %v678 = vld [vmem:[%s1] sm:$0xff]
      %v679 = vld [vmem:[%s1 + $0x8] sm:$0xff]
      %v680 = vld [vmem:[%s1 + $0x10] sm:$0xff]
      %v681 = vmul.f32 %v675, %v678
      %v682 = vmul.f32 %v676, %v679
      %v683 = vmul.f32 %v677, %v680
      %v684 = vld [vmem:[#allocation6] sm:$0xff]
      %v685 = vld [vmem:[#allocation6 + $0x8] sm:$0xff]
      %v686 = vld [vmem:[#allocation6 + $0x10] sm:$0xff]
      %v687 = vld [vmem:[#allocation6 + $0x18] sm:$0xff]
      %v688 = vld [vmem:[#allocation6 + $0x20] sm:$0xff]
      %v689 = vld [vmem:[#allocation6 + $0x28] sm:$0xff]
      %v690 = vld [vmem:[#allocation6 + $0x30] sm:$0xff]
      %v691 = vld [vmem:[#allocation6 + $0x38] sm:$0xff]
      %v692 = vld [vmem:[#allocation6 + $0x40] sm:$0xff]
      %v693 = vld [vmem:[#allocation6 + $0x48] sm:$0xff]
      %v694 = vld [vmem:[#allocation6 + $0x50] sm:$0xff]
      %v695 = vld [vmem:[#allocation6 + $0x58] sm:$0xff]
      %v696 = vld [vmem:[#allocation6 + $0x60] sm:$0xff]
      %v697 = vld [vmem:[#allocation6 + $0x68] sm:$0xff]
      %v698 = vld [vmem:[#allocation6 + $0x70] sm:$0xff]
      %v699 = vld [vmem:[#allocation6 + $0x78] sm:$0xff]
      %v700 = vld [vmem:[#allocation6 + $0x80] sm:$0xff]
      %v701 = vld [vmem:[#allocation6 + $0x88] sm:$0xff]
      %v702 = vld [vmem:[#allocation6 + $0x90] sm:$0xff]
      %v703 = vld [vmem:[#allocation6 + $0x98] sm:$0xff]
      %v704 = vld [vmem:[#allocation6 + $0xa0] sm:$0xff]
      %v705 = vld [vmem:[#allocation6 + $0xa8] sm:$0xff]
      %v706 = vld [vmem:[#allocation6 + $0xb0] sm:$0xff]
      %v707 = vld [vmem:[#allocation6 + $0xb8] sm:$0xff]
      %v708 = vld [vmem:[#allocation6 + $0xc0] sm:$0xff]
      %v709 = vld [vmem:[#allocation6 + $0xc8] sm:$0xff]
      %v710 = vld [vmem:[#allocation6 + $0xd0] sm:$0xff]
      %v711 = vld [vmem:[#allocation6 + $0xd8] sm:$0xff]
      %v712 = vld [vmem:[#allocation6 + $0xe0] sm:$0xff]
      %v713 = vld [vmem:[#allocation6 + $0xe8] sm:$0xff]
      %v714 = vld [vmem:[#allocation6 + $0xf0] sm:$0xff]
      %v715 = vld [vmem:[#allocation6 + $0xf8] sm:$0xff]
      %v716 = vld [vmem:[#allocation6 + $0x100] sm:$0xff]
      %v717 = vld [vmem:[#allocation6 + $0x108] sm:$0xff]
      %v718 = vld [vmem:[#allocation6 + $0x110] sm:$0xff]
      %v719 = vld [vmem:[#allocation6 + $0x118] sm:$0xff]
      %v720 = vld [vmem:[#allocation6 + $0x120] sm:$0xff]
      %v721 = vld [vmem:[#allocation6 + $0x128] sm:$0xff]
      %v722 = vld [vmem:[#allocation6 + $0x130] sm:$0xff]
      %v723 = vld [vmem:[#allocation6 + $0x138] sm:$0xff]
      %v724 = vld [vmem:[#allocation6 + $0x140] sm:$0xff]
      %v725 = vld [vmem:[#allocation6 + $0x148] sm:$0xff]
      %v726 = vld [vmem:[#allocation6 + $0x150] sm:$0xff]
      %v727 = vld [vmem:[#allocation6 + $0x158] sm:$0xff]
      %v728 = vld [vmem:[#allocation6 + $0x160] sm:$0xff]
      %v729 = vld [vmem:[#allocation6 + $0x168] sm:$0xff]
      %v730 = vld [vmem:[#allocation6 + $0x170] sm:$0xff]
      %v731 = vld [vmem:[#allocation6 + $0x178] sm:$0xff]
      %v732 = vld [vmem:[%s4] sm:$0x1]
      %v734 = vlaneseq
      %v735 = vshrl.u32 %v734, 7
      %v736 = vsub.s32 0, %v735
      %v737 = vrot.slane %v732, %v736
      %739 = vmatprep.subr.mxu0 0.0
      %740 = vmatpush1.msra.mxu0 %v684
      %741 = vmatprep.subr.mxu0 0.0
      %742 = vmatpush1.msra.mxu0 %v685
      %743 = vmatprep.subr.mxu0 0.0
      %744 = vmatpush1.msra.mxu0 %v686
      %745 = vmatprep.subr.mxu0 0.0
      %746 = vmatpush1.msra.mxu0 %v687
      %747 = vmatprep.subr.mxu0 0.0
      %748 = vmatpush1.msra.mxu0 %v688
      %749 = vmatprep.subr.mxu0 0.0
      %750 = vmatpush1.msra.mxu0 %v689
      %751 = vmatprep.subr.mxu0 0.0
      %752 = vmatpush1.msra.mxu0 %v690
      %753 = vmatprep.subr.mxu0 0.0
      %754 = vmatpush1.msra.mxu0 %v691
      %755 = vmatprep.subr.mxu0 0.0
      %756 = vmatpush1.msra.mxu0 %v692
      %757 = vmatprep.subr.mxu0 0.0
      %758 = vmatpush1.msra.mxu0 %v693
      %759 = vmatprep.subr.mxu0 0.0
      %760 = vmatpush1.msra.mxu0 %v694
      %761 = vmatprep.subr.mxu0 0.0
      %762 = vmatpush1.msra.mxu0 %v695
      %763 = vmatprep.subr.mxu0 0.0
      %764 = vmatpush1.msra.mxu0 %v696
      %765 = vmatprep.subr.mxu0 0.0
      %766 = vmatpush1.msra.mxu0 %v697
      %767 = vmatprep.subr.mxu0 0.0
      %768 = vmatpush1.msra.mxu0 %v698
      %769 = vmatprep.subr.mxu0 0.0
      %770 = vmatpush1.msra.mxu0 %v699
      %771 = vmatprep.subr.mxu0 0.0
      %772 = vmatpush1.msra.mxu0 %v700
      %773 = vmatprep.subr.mxu0 0.0
      %774 = vmatpush1.msra.mxu0 %v701
      %775 = vmatprep.subr.mxu0 0.0
      %776 = vmatpush1.msra.mxu0 %v702
      %777 = vmatprep.subr.mxu0 0.0
      %778 = vmatpush1.msra.mxu0 %v703
      %779 = vmatprep.subr.mxu0 0.0
      %780 = vmatpush1.msra.mxu0 %v704
      %781 = vmatprep.subr.mxu0 0.0
      %782 = vmatpush1.msra.mxu0 %v705
      %783 = vmatprep.subr.mxu0 0.0
      %784 = vmatpush1.msra.mxu0 %v706
      %785 = vmatprep.subr.mxu0 0.0
      %786 = vmatpush1.msra.mxu0 %v707
      %787 = vmatprep.subr.mxu0 0.0
      %788 = vmatpush1.msra.mxu0 %v708
      %789 = vmatprep.subr.mxu0 0.0
      %790 = vmatpush1.msra.mxu0 %v709
      %791 = vmatprep.subr.mxu0 0.0
      %792 = vmatpush1.msra.mxu0 %v710
      %793 = vmatprep.subr.mxu0 0.0
      %794 = vmatpush1.msra.mxu0 %v711
      %795 = vmatprep.subr.mxu0 0.0
      %796 = vmatpush1.msra.mxu0 %v712
      %797 = vmatprep.subr.mxu0 0.0
      %798 = vmatpush1.msra.mxu0 %v713
      %799 = vmatprep.subr.mxu0 0.0
      %800 = vmatpush1.msra.mxu0 %v714
      %801 = vmatprep.subr.mxu0 0.0
      %802 = vmatpush1.msra.mxu0 %v715
      %803 = vmatprep.mubr.f32.mxu0 %v682
      %804 = vmatmul.mubr.f32.gmra.mrb[0].mxu0 %v681
      %v805 = vpop.f32.mrb[0].mxu0
      %v806 = vadd.f32 %v737, %v805
      %v807 = vpop.f32.mrb[0].mxu0
      %808 = vdwg.mxu0
      %809 = vmatprep.subr.mxu0 0.0
      %810 = vmatpush1.msra.mxu0 %v716
      %811 = vmatprep.subr.mxu0 0.0
      %812 = vmatpush1.msra.mxu0 %v717
      %813 = vmatprep.subr.mxu0 0.0
      %814 = vmatpush1.msra.mxu0 %v718
      %815 = vmatprep.subr.mxu0 0.0
      %816 = vmatpush1.msra.mxu0 %v719
      %817 = vmatprep.subr.mxu0 0.0
      %818 = vmatpush1.msra.mxu0 %v720
      %819 = vmatprep.subr.mxu0 0.0
      %820 = vmatpush1.msra.mxu0 %v721
      %821 = vmatprep.subr.mxu0 0.0
      %822 = vmatpush1.msra.mxu0 %v722
      %823 = vmatprep.subr.mxu0 0.0
      %824 = vmatpush1.msra.mxu0 %v723
      %825 = vmatprep.subr.mxu0 0.0
      %826 = vmatpush1.msra.mxu0 %v724
      %827 = vmatprep.subr.mxu0 0.0
      %828 = vmatpush1.msra.mxu0 %v725
      %829 = vmatprep.subr.mxu0 0.0
      %830 = vmatpush1.msra.mxu0 %v726
      %831 = vmatprep.subr.mxu0 0.0
      %832 = vmatpush1.msra.mxu0 %v727
      %833 = vmatprep.subr.mxu0 0.0
      %834 = vmatpush1.msra.mxu0 %v728
      %835 = vmatprep.subr.mxu0 0.0
      %836 = vmatpush1.msra.mxu0 %v729
      %837 = vmatprep.subr.mxu0 0.0
      %838 = vmatpush1.msra.mxu0 %v730
      %839 = vmatprep.subr.mxu0 0.0
      %840 = vmatpush1.msra.mxu0 %v731
      %841 = vmatprep.subr.mxu0 0.0
      %842 = vmatpush1.msra.mxu0 0.0
      %843 = vmatprep.subr.mxu0 0.0
      %844 = vmatpush1.msra.mxu0 0.0
      %845 = vmatprep.subr.mxu0 0.0
      %846 = vmatpush1.msra.mxu0 0.0
      %847 = vmatprep.subr.mxu0 0.0
      %848 = vmatpush1.msra.mxu0 0.0
      %849 = vmatprep.subr.mxu0 0.0
      %850 = vmatpush1.msra.mxu0 0.0
      %851 = vmatprep.subr.mxu0 0.0
      %852 = vmatpush1.msra.mxu0 0.0
      %853 = vmatprep.subr.mxu0 0.0
      %854 = vmatpush1.msra.mxu0 0.0
      %855 = vmatprep.subr.mxu0 0.0
      %856 = vmatpush1.msra.mxu0 0.0
      %857 = vmatprep.subr.mxu0 0.0
      %858 = vmatpush1.msra.mxu0 0.0
      %859 = vmatprep.subr.mxu0 0.0
      %860 = vmatpush1.msra.mxu0 0.0
      %861 = vmatprep.subr.mxu0 0.0
      %862 = vmatpush1.msra.mxu0 0.0
      %863 = vmatprep.subr.mxu0 0.0
      %864 = vmatpush1.msra.mxu0 0.0
      %865 = vmatprep.subr.mxu0 0.0
      %866 = vmatpush1.msra.mxu0 0.0
      %867 = vmatprep.subr.mxu0 0.0
      %868 = vmatpush1.msra.mxu0 0.0
      %869 = vmatprep.subr.mxu0 0.0
      %870 = vmatpush1.msra.mxu0 0.0
      %871 = vmatprep.subr.mxu0 0.0
      %872 = vmatpush1.msra.mxu0 0.0
      %873 = vmatprep.mubr.f32.mxu0 0.0
      %874 = vmatmul.mubr.f32.gmra.mrb[0].mxu0 %v683
      %v875 = vpop.f32.mrb[0].mxu0
      %v876 = vadd.f32 %v806, %v875
      %v877 = vpop.f32.mrb[0].mxu0
      %878 = vdwg.mxu0
      %v879 = vmax.f32 %v876, 0.0
      %v880 = vld [vmem:[#allocation8] sm:$0xff]
      %v881 = vld [vmem:[#allocation8 + $0x8] sm:$0xff]
      %v882 = vld [vmem:[#allocation8 + $0x10] sm:$0xff]
      %v883 = vld [vmem:[#allocation8 + $0x18] sm:$0xff]
      %v884 = vld [vmem:[#allocation8 + $0x20] sm:$0xff]
      %v885 = vld [vmem:[#allocation8 + $0x28] sm:$0xff]
      %v886 = vld [vmem:[#allocation8 + $0x30] sm:$0xff]
      %v887 = vld [vmem:[#allocation8 + $0x38] sm:$0xff]
      %v888 = vld [vmem:[#allocation8 + $0x40] sm:$0xff]
      %v889 = vld [vmem:[#allocation8 + $0x48] sm:$0xff]
      %v890 = vld [vmem:[#allocation8 + $0x50] sm:$0xff]
      %v891 = vld [vmem:[#allocation8 + $0x58] sm:$0xff]
      %v892 = vld [vmem:[#allocation8 + $0x60] sm:$0xff]
      %v893 = vld [vmem:[#allocation8 + $0x68] sm:$0xff]
      %v894 = vld [vmem:[#allocation8 + $0x70] sm:$0xff]
      %v895 = vld [vmem:[#allocation8 + $0x78] sm:$0xff]
      %v896 = vld [vmem:[%s6] sm:$0x1]
      %v898 = vlaneseq
      %v899 = vshrl.u32 %v898, 7
      %v900 = vsub.s32 0, %v899
      %v901 = vrot.slane %v896, %v900
      %903 = vmatprep.subr.mxu0 0.0
      %904 = vmatpush1.msra.mxu0 %v880
      %905 = vmatprep.subr.mxu0 0.0
      %906 = vmatpush1.msra.mxu0 %v881
      %907 = vmatprep.subr.mxu0 0.0
      %908 = vmatpush1.msra.mxu0 %v882
      %909 = vmatprep.subr.mxu0 0.0
      %910 = vmatpush1.msra.mxu0 %v883
      %911 = vmatprep.subr.mxu0 0.0
      %912 = vmatpush1.msra.mxu0 %v884
      %913 = vmatprep.subr.mxu0 0.0
      %914 = vmatpush1.msra.mxu0 %v885
      %915 = vmatprep.subr.mxu0 0.0
      %916 = vmatpush1.msra.mxu0 %v886
      %917 = vmatprep.subr.mxu0 0.0
      %918 = vmatpush1.msra.mxu0 %v887
      %919 = vmatprep.subr.mxu0 0.0
      %920 = vmatpush1.msra.mxu0 %v888
      %921 = vmatprep.subr.mxu0 0.0
      %922 = vmatpush1.msra.mxu0 %v889
      %923 = vmatprep.subr.mxu0 0.0
      %924 = vmatpush1.msra.mxu0 %v890
      %925 = vmatprep.subr.mxu0 0.0
      %926 = vmatpush1.msra.mxu0 %v891
      %927 = vmatprep.subr.mxu0 0.0
      %928 = vmatpush1.msra.mxu0 %v892
      %929 = vmatprep.subr.mxu0 0.0
      %930 = vmatpush1.msra.mxu0 %v893
      %931 = vmatprep.subr.mxu0 0.0
      %932 = vmatpush1.msra.mxu0 %v894
      %933 = vmatprep.subr.mxu0 0.0
      %934 = vmatpush1.msra.mxu0 %v895
      %935 = vmatprep.subr.mxu0 0.0
      %936 = vmatpush1.msra.mxu0 0.0
      %937 = vmatprep.subr.mxu0 0.0
      %938 = vmatpush1.msra.mxu0 0.0
      %939 = vmatprep.subr.mxu0 0.0
      %940 = vmatpush1.msra.mxu0 0.0
      %941 = vmatprep.subr.mxu0 0.0
      %942 = vmatpush1.msra.mxu0 0.0
      %943 = vmatprep.subr.mxu0 0.0
      %944 = vmatpush1.msra.mxu0 0.0
      %945 = vmatprep.subr.mxu0 0.0
      %946 = vmatpush1.msra.mxu0 0.0
      %947 = vmatprep.subr.mxu0 0.0
      %948 = vmatpush1.msra.mxu0 0.0
      %949 = vmatprep.subr.mxu0 0.0
      %950 = vmatpush1.msra.mxu0 0.0
      %951 = vmatprep.subr.mxu0 0.0
      %952 = vmatpush1.msra.mxu0 0.0
      %953 = vmatprep.subr.mxu0 0.0
      %954 = vmatpush1.msra.mxu0 0.0
      %955 = vmatprep.subr.mxu0 0.0
      %956 = vmatpush1.msra.mxu0 0.0
      %957 = vmatprep.subr.mxu0 0.0
      %958 = vmatpush1.msra.mxu0 0.0
      %959 = vmatprep.subr.mxu0 0.0
      %960 = vmatpush1.msra.mxu0 0.0
      %961 = vmatprep.subr.mxu0 0.0
      %962 = vmatpush1.msra.mxu0 0.0
      %963 = vmatprep.subr.mxu0 0.0
      %964 = vmatpush1.msra.mxu0 0.0
      %965 = vmatprep.subr.mxu0 0.0
      %966 = vmatpush1.msra.mxu0 0.0
      %967 = vmatprep.mubr.f32.mxu0 0.0
      %968 = vmatmul.mubr.f32.gmra.mrb[0].mxu0 %v879
      %v969 = vpop.f32.mrb[0].mxu0
      %v970 = vadd.f32 %v901, %v969
      %v971 = vpop.f32.mrb[0].mxu0
      %972 = vdwg.mxu0
      %v973 = vmax.f32 %v970, 0.0
      %v974 = vld [vmem:[#allocation9] sm:$0xff]
      %v975 = vld [vmem:[#allocation9 + $0x8] sm:$0xff]
      %v976 = vld [vmem:[#allocation9 + $0x10] sm:$0xff]
      %v977 = vld [vmem:[#allocation9 + $0x18] sm:$0xff]
      %v978 = vld [vmem:[#allocation9 + $0x20] sm:$0xff]
      %v979 = vld [vmem:[#allocation9 + $0x28] sm:$0xff]
      %v980 = vld [vmem:[#allocation9 + $0x30] sm:$0xff]
      %v981 = vld [vmem:[#allocation9 + $0x38] sm:$0xff]
      %v982 = vld [vmem:[#allocation9 + $0x40] sm:$0xff]
      %v983 = vld [vmem:[#allocation9 + $0x48] sm:$0xff]
      %v984 = vld [vmem:[#allocation9 + $0x50] sm:$0xff]
      %v985 = vld [vmem:[#allocation9 + $0x58] sm:$0xff]
      %v986 = vld [vmem:[#allocation9 + $0x60] sm:$0xff]
      %v987 = vld [vmem:[#allocation9 + $0x68] sm:$0xff]
      %v988 = vld [vmem:[#allocation9 + $0x70] sm:$0xff]
      %v989 = vld [vmem:[#allocation9 + $0x78] sm:$0xff]
      %v990 = vld [vmem:[%s8] sm:$0x1]
      %v992 = vlaneseq
      %v993 = vshrl.u32 %v992, 7
      %v994 = vsub.s32 0, %v993
      %v995 = vrot.slane %v990, %v994
      %997 = vmatprep.subr.mxu0 0.0
      %998 = vmatpush1.msra.mxu0 %v974
      %999 = vmatprep.subr.mxu0 0.0
      %1000 = vmatpush1.msra.mxu0 %v975
      %1001 = vmatprep.subr.mxu0 0.0
      %1002 = vmatpush1.msra.mxu0 %v976
      %1003 = vmatprep.subr.mxu0 0.0
      %1004 = vmatpush1.msra.mxu0 %v977
      %1005 = vmatprep.subr.mxu0 0.0
      %1006 = vmatpush1.msra.mxu0 %v978
      %1007 = vmatprep.subr.mxu0 0.0
      %1008 = vmatpush1.msra.mxu0 %v979
      %1009 = vmatprep.subr.mxu0 0.0
      %1010 = vmatpush1.msra.mxu0 %v980
      %1011 = vmatprep.subr.mxu0 0.0
      %1012 = vmatpush1.msra.mxu0 %v981
      %1013 = vmatprep.subr.mxu0 0.0
      %1014 = vmatpush1.msra.mxu0 %v982
      %1015 = vmatprep.subr.mxu0 0.0
      %1016 = vmatpush1.msra.mxu0 %v983
      %1017 = vmatprep.subr.mxu0 0.0
      %1018 = vmatpush1.msra.mxu0 %v984
      %1019 = vmatprep.subr.mxu0 0.0
      %1020 = vmatpush1.msra.mxu0 %v985
      %1021 = vmatprep.subr.mxu0 0.0
      %1022 = vmatpush1.msra.mxu0 %v986
      %1023 = vmatprep.subr.mxu0 0.0
      %1024 = vmatpush1.msra.mxu0 %v987
      %1025 = vmatprep.subr.mxu0 0.0
      %1026 = vmatpush1.msra.mxu0 %v988
      %1027 = vmatprep.subr.mxu0 0.0
      %1028 = vmatpush1.msra.mxu0 %v989
      %1029 = vmatprep.subr.mxu0 0.0
      %1030 = vmatpush1.msra.mxu0 0.0
      %1031 = vmatprep.subr.mxu0 0.0
      %1032 = vmatpush1.msra.mxu0 0.0
      %1033 = vmatprep.subr.mxu0 0.0
      %1034 = vmatpush1.msra.mxu0 0.0
      %1035 = vmatprep.subr.mxu0 0.0
      %1036 = vmatpush1.msra.mxu0 0.0
      %1037 = vmatprep.subr.mxu0 0.0
      %1038 = vmatpush1.msra.mxu0 0.0
      %1039 = vmatprep.subr.mxu0 0.0
      %1040 = vmatpush1.msra.mxu0 0.0
      %1041 = vmatprep.subr.mxu0 0.0
      %1042 = vmatpush1.msra.mxu0 0.0
      %1043 = vmatprep.subr.mxu0 0.0
      %1044 = vmatpush1.msra.mxu0 0.0
      %1045 = vmatprep.subr.mxu0 0.0
      %1046 = vmatpush1.msra.mxu0 0.0
      %1047 = vmatprep.subr.mxu0 0.0
      %1048 = vmatpush1.msra.mxu0 0.0
      %1049 = vmatprep.subr.mxu0 0.0
      %1050 = vmatpush1.msra.mxu0 0.0
      %1051 = vmatprep.subr.mxu0 0.0
      %1052 = vmatpush1.msra.mxu0 0.0
      %1053 = vmatprep.subr.mxu0 0.0
      %1054 = vmatpush1.msra.mxu0 0.0
      %1055 = vmatprep.subr.mxu0 0.0
      %1056 = vmatpush1.msra.mxu0 0.0
      %1057 = vmatprep.subr.mxu0 0.0
      %1058 = vmatpush1.msra.mxu0 0.0
      %1059 = vmatprep.subr.mxu0 0.0
      %1060 = vmatpush1.msra.mxu0 0.0
      %1061 = vmatprep.mubr.f32.mxu0 0.0
      %1062 = vmatmul.mubr.f32.gmra.mrb[0].mxu0 %v973
      %v1063 = vpop.f32.mrb[0].mxu0
      %v1064 = vadd.f32 %v995, %v1063
      %v1065 = vpop.f32.mrb[0].mxu0
      %1066 = vdwg.mxu0
      %1067 = vst [vmem:[#allocation11] sm:$0xff] %v1064
    $region61: #{tpu_custom_call.1} parent=1 // pred_fallthru
      _
    // Predicated region
    $region62: #{tpu_custom_call.1} parent=1 // pred_check
      _
    $region63: #{tpu_custom_call.1} parent=1 // pred_check_branch
      %1069 = sbr.rel (0) target = $region65
    $region64: #{tpu_custom_call.1} parent=1 // pred_region
      %s1071 = ssub.s32 128, 128
      %1072 = vsyncadd [#allocation5], %s1071
      %s1074 = sshll.u32 [#allocation11], 4
      %s1075 = int_to_ptr.vmem [resolvable:$true] %s1074
      %1077 = dma.vmem_to_hbm [thread:$0]  %s1075, 128, %s9, [#allocation5]
    $region65: #{tpu_custom_call.1} parent=1 // pred_fallthru
      _
    // Predicated region
    $region66: #{tpu_custom_call.1} parent=1 // pred_check
      _
    $region67: #{tpu_custom_call.1} parent=1 // pred_check_branch
      %1079 = sbr.rel (0) target = $region69
    $region68: #{tpu_custom_call.1} parent=1 // pred_region
      %1080 = dma.done [#allocation5], 128
    $region69: #{tpu_custom_call.1} parent=1 // pred_fallthru
      _
    %1081 = vsyncpa [#allocation4], 1
    %1082 = vsyncpa [#allocation7], 1
    %1083 = vsyncpa [#allocation10], 1
    %1084 = vsyncpa [#allocation5], 1

</llo_original>
